<compile_context>
chip_gen: v5e
topology: v5e:2x2
jax: 0.10.0
libtpu: 0.0.40
codegen_flags: <defaults>
</compile_context>

<pallas_src>
import functools

import jax
import jax.numpy as jnp
from jax.experimental import pallas as pl
from jax.experimental.pallas import tpu as pltpu

P = 128            # lane width: every layer's out-dim is zero-padded to 128
MIN_M = 256        # minimum batch tile (keeps the MXU pipeline full)
MAX_TILE_B = 2048  # default cap: fits v5e's 16 MiB default scoped VMEM


def _round_up(x, m):
    return ((x + m - 1) // m) * m


def _mlp_kernel(x_ref, w_ref, b_ref, o_ref):
    """x_ref: [TB, F] f32, w_ref: [L, P, P] bf16 (zero-padded),
    b_ref: [L, P] f32 (zero-padded), o_ref: [TB, P] f32."""
    n_layers = w_ref.shape[0]
    f_in = x_ref.shape[-1]
    # Activations are carried in bf16; bias add + ReLU stay in f32 and the
    # downcast is fused into the epilogue (identical numerics, half the traffic).
    h = x_ref[...].astype(jnp.bfloat16)                      # [TB, F] bf16
    for layer in range(n_layers):                            # static unroll, L = 7
        if layer == 0:
            w = w_ref[0, :f_in, :]                           # layer 0 contracts K = F
        else:
            w = w_ref[layer]                                 # [P, P] bf16
        acc = jnp.dot(h, w, preferred_element_type=jnp.float32)
        acc = acc + b_ref[layer]                             # f32 bias, lane broadcast
        if layer < n_layers - 1:
            h = jnp.maximum(acc, 0.0).astype(jnp.bfloat16)   # fused ReLU + downcast
        else:
            o_ref[...] = acc.astype(o_ref.dtype)             # lane-dense f32 store


def pack_params(params):
    """Pack per-layer (W[in,out], b[1,out]) into zero-padded slabs.

    Call ONCE (model-build time) and reuse the slabs for every forward call.
    Zero padding is numerically exact (padded rows/cols contribute exactly 0).
    Returns (w_slab [L,P,P] bf16, b_slab [L,P] f32).
    """
    n_layers = len(params)
    w_slab = jnp.zeros((n_layers, P, P), jnp.float32)
    b_slab = jnp.zeros((n_layers, P), jnp.float32)
    for layer, (w, b) in enumerate(params):
        fi, fo = w.shape
        assert fi <= P and fo <= P, "layer widths must fit in one 128-lane tile"
        w_slab = w_slab.at[layer, :fi, :fo].set(w)
        b_slab = b_slab.at[layer, :fo].set(b.reshape(-1))
    return w_slab.astype(jnp.bfloat16), b_slab


def _choose_tile_b(batch, tile_b_max):
    b8 = max(8, _round_up(batch, 8))
    if b8 <= MIN_M:
        return b8            # tiny batch: one tile, latency-bound regardless
    # Aim for >= 4 grid steps (both v7x TensorCores busy + pipeline depth)
    # while never shrinking M below MIN_M (128x128 weights already cap the
    # 256-wide MXU at ~25%; large M is the only lever).
    tb = max(MIN_M, _round_up(b8 // 4, MIN_M))
    return min(tb, max(MIN_M, _round_up(tile_b_max, 8)))


@functools.partial(jax.jit, static_argnames=("out_features", "tile_b_max"))
def perceptron_bwd_forward(x, w_slab, b_slab, *, out_features,
                           tile_b_max=MAX_TILE_B):
    """x: [B, in_features] f32.  w_slab/b_slab: from pack_params()."""
    B, F = x.shape
    n_layers = w_slab.shape[0]
    assert F <= P, "in_features must fit in one 128-lane tile"

    tb = _choose_tile_b(B, tile_b_max)
    b_pad = _round_up(max(B, 8), tb)
    # Only the batch dim is padded (inside jit); the feature dim stays F, so no
    # extra full-width copy of x is materialized in HBM.
    x_pad = jnp.pad(x, ((0, b_pad - B), (0, 0)))

    grid = (b_pad // tb,)

    flops = 2 * b_pad * (F * P + (n_layers - 1) * P * P)
    bytes_accessed = (4 * b_pad * F             # x in (f32)
                      + 2 * n_layers * P * P    # bf16 weights (resident)
                      + 4 * n_layers * P        # f32 biases (resident)
                      + 4 * b_pad * P)          # f32 out (lane-dense)
    cost = pl.CostEstimate(flops=flops, transcendentals=0,
                           bytes_accessed=bytes_accessed)

    # v5e's default scoped VMEM is 16 MiB; only needs raising for very large
    # batch tiles (default tile_b_max=2048 fits comfortably everywhere).
    vmem_limit = (64 * 1024 * 1024) if tb > 2048 else None

    out_pad = pl.pallas_call(
        _mlp_kernel,
        out_shape=jax.ShapeDtypeStruct((b_pad, P), jnp.float32),
        grid=grid,
        in_specs=[
            pl.BlockSpec((tb, F), lambda i: (i, 0)),               # batch-tiled x
            pl.BlockSpec((n_layers, P, P), lambda i: (0, 0, 0)),   # resident weights
            pl.BlockSpec((n_layers, P), lambda i: (0, 0)),         # resident biases
        ],
        out_specs=pl.BlockSpec((tb, P), lambda i: (i, 0)),         # lane-dense out
        compiler_params=pltpu.CompilerParams(
            dimension_semantics=("parallel",),
            vmem_limit_bytes=vmem_limit),
        cost_estimate=cost,
    )(x_pad, w_slab, b_slab)

    return out_pad[:B, :out_features]


def init_params(key, in_features, out_features):
    """Deterministic init mirroring nn.Linear's U(-1/sqrt(fan_in), 1/sqrt(fan_in)).
    Weights stored as [in, out] (transpose of PyTorch layout)."""
    dims = [
        (in_features, in_features),                          # hidden1
        (in_features, in_features),                          # hidden2
        (in_features, int(0.5 * in_features)),               # hidden3
        (int(0.5 * in_features), int(0.5 * in_features)),    # hidden4
        (int(0.5 * in_features), int(0.25 * in_features)),   # hidden5
        (int(0.25 * in_features), 5 * out_features),         # hidden6
        (5 * out_features, out_features),                    # output
    ]
    params = []
    for (fan_in, fan_out) in dims:
        key, kw, kb = jax.random.split(key, 3)
        bound = 1.0 / jnp.sqrt(jnp.float32(fan_in))
        w = jax.random.uniform(kw, (fan_in, fan_out), jnp.float32, -bound, bound)
        b = jax.random.uniform(kb, (1, fan_out), jnp.float32, -bound, bound)
        params.append((w, b))
    return params


def reference_forward_bf16(x, params):
    """Pure-JAX reference mirroring the kernel's dtype policy
    (bf16 matmul operands, f32 accumulation / bias / ReLU)."""
    h = x
    for i, (w, b) in enumerate(params):
        h = jnp.dot(h.astype(jnp.bfloat16), w.astype(jnp.bfloat16),
                    preferred_element_type=jnp.float32) + b
        if i < len(params) - 1:
            h = jnp.maximum(h, 0.0)
    return h


def reference_forward_f32(x, params):
    h = x
    for i, (w, b) in enumerate(params):
        h = h @ w + b
        if i < len(params) - 1:
            h = jnp.maximum(h, 0.0)
    return h


if __name__ == "__main__":
    key = jax.random.PRNGKey(0)
    in_features = 32
    out_features = 4
    batch = 2

    key, kx = jax.random.split(key)
    x = jax.random.normal(kx, (batch, in_features), jnp.float32)
    params = init_params(key, in_features, out_features)

    # Pack once (hoisted out of the per-call path), reuse for every forward.
    w_slab, b_slab = pack_params(params)

    out = perceptron_bwd_forward(x, w_slab, b_slab, out_features=out_features)
    out = jax.block_until_ready(out)

    assert out.shape == (batch, out_features), out.shape

    ref_bf16 = reference_forward_bf16(x, params)
    assert jnp.allclose(out, ref_bf16, atol=1e-3, rtol=1e-3), "mismatch vs bf16 reference"

    # loose sanity check against the pure-f32 reference (bf16 matmuls introduce
    # small, bounded error)
    ref_f32 = reference_forward_f32(x, params)
    assert jnp.allclose(out, ref_f32, atol=5e-2, rtol=5e-2), "mismatch vs f32 reference"

    print("KERNEL_OK")
</pallas_src>

<mosaic_0001>
module attributes {stable_mosaic.version = 11 : i64} {
  func.func @_mlp_kernel(%arg0: i32, %arg1: memref<8x32xf32, #tpu.memory_space<vmem>>, %arg2: memref<7x128x128xbf16, #tpu.memory_space<vmem>>, %arg3: memref<7x128xf32, #tpu.memory_space<vmem>>, %arg4: memref<8x128xf32, #tpu.memory_space<vmem>>) attributes {dimension_semantics = [#tpu.dimension_semantics<parallel>], iteration_bounds = array<i64: 1>, scalar_prefetch = 0 : i64, scratch_operands = 0 : i64, tpu.core_type = #tpu.core_type<tc>, window_params = [{transform_indices = @transform_0, window_bounds = array<i64: 8, 32>}, {pipeline_mode = #tpu.pipeline_mode<synchronous>, transform_indices = @transform_1, window_bounds = array<i64: 7, 128, 128>}, {pipeline_mode = #tpu.pipeline_mode<synchronous>, transform_indices = @transform_2, window_bounds = array<i64: 7, 128>}, {transform_indices = @transform_3, window_bounds = array<i64: 8, 128>}]} {
    %c0 = arith.constant 0 : index
    %c0_0 = arith.constant 0 : index
    %0 = vector.load %arg1[%c0, %c0_0] : memref<8x32xf32, #tpu.memory_space<vmem>>, vector<8x32xf32>
    %1 = arith.truncf %0 : vector<8x32xf32> to vector<8x32xbf16>
    %c0_1 = arith.constant 0 : index
    %c0_2 = arith.constant 0 : index
    %c0_3 = arith.constant 0 : index
    %2 = vector.load %arg2[%c0_1, %c0_2, %c0_3] : memref<7x128x128xbf16, #tpu.memory_space<vmem>>, vector<1x32x128xbf16>
    %3 = vector.shape_cast %2 : vector<1x32x128xbf16> to vector<32x128xbf16>
    %cst = arith.constant dense<0.000000e+00> : vector<8x128xf32>
    %4 = tpu.matmul %1, %3, %cst {dimension_numbers = #tpu.dot_dimension_numbers<[1], [0], [0], [1], [0, 0, 1, 1], [], []>} : vector<8x32xbf16>, vector<32x128xbf16>, vector<8x128xf32> -> vector<8x128xf32>
    %c0_4 = arith.constant 0 : index
    %c0_5 = arith.constant 0 : index
    %5 = vector.load %arg3[%c0_4, %c0_5] : memref<7x128xf32, #tpu.memory_space<vmem>>, vector<1x128xf32>
    %6 = vector.shape_cast %5 : vector<1x128xf32> to vector<128xf32>
    %7 = vector.shape_cast %6 : vector<128xf32> to vector<1x128xf32>
    %8 = vector.broadcast %7 : vector<1x128xf32> to vector<8x128xf32>
    %9 = arith.addf %4, %8 : vector<8x128xf32>
    %cst_6 = arith.constant 0.000000e+00 : f32
    %10 = vector.broadcast %cst_6 : f32 to vector<8x128xf32>
    %11 = arith.maximumf %9, %10 : vector<8x128xf32>
    %12 = arith.truncf %11 : vector<8x128xf32> to vector<8x128xbf16>
    %c1 = arith.constant 1 : index
    %c0_7 = arith.constant 0 : index
    %c0_8 = arith.constant 0 : index
    %13 = vector.load %arg2[%c1, %c0_7, %c0_8] : memref<7x128x128xbf16, #tpu.memory_space<vmem>>, vector<1x128x128xbf16>
    %14 = vector.shape_cast %13 : vector<1x128x128xbf16> to vector<128x128xbf16>
    %cst_9 = arith.constant dense<0.000000e+00> : vector<8x128xf32>
    %15 = tpu.matmul %12, %14, %cst_9 {dimension_numbers = #tpu.dot_dimension_numbers<[1], [0], [0], [1], [0, 0, 1, 1], [], []>} : vector<8x128xbf16>, vector<128x128xbf16>, vector<8x128xf32> -> vector<8x128xf32>
    %c1_10 = arith.constant 1 : index
    %c0_11 = arith.constant 0 : index
    %16 = vector.load %arg3[%c1_10, %c0_11] : memref<7x128xf32, #tpu.memory_space<vmem>>, vector<1x128xf32>
    %17 = vector.shape_cast %16 : vector<1x128xf32> to vector<128xf32>
    %18 = vector.shape_cast %17 : vector<128xf32> to vector<1x128xf32>
    %19 = vector.broadcast %18 : vector<1x128xf32> to vector<8x128xf32>
    %20 = arith.addf %15, %19 : vector<8x128xf32>
    %cst_12 = arith.constant 0.000000e+00 : f32
    %21 = vector.broadcast %cst_12 : f32 to vector<8x128xf32>
    %22 = arith.maximumf %20, %21 : vector<8x128xf32>
    %23 = arith.truncf %22 : vector<8x128xf32> to vector<8x128xbf16>
    %c2 = arith.constant 2 : index
    %c0_13 = arith.constant 0 : index
    %c0_14 = arith.constant 0 : index
    %24 = vector.load %arg2[%c2, %c0_13, %c0_14] : memref<7x128x128xbf16, #tpu.memory_space<vmem>>, vector<1x128x128xbf16>
    %25 = vector.shape_cast %24 : vector<1x128x128xbf16> to vector<128x128xbf16>
    %cst_15 = arith.constant dense<0.000000e+00> : vector<8x128xf32>
    %26 = tpu.matmul %23, %25, %cst_15 {dimension_numbers = #tpu.dot_dimension_numbers<[1], [0], [0], [1], [0, 0, 1, 1], [], []>} : vector<8x128xbf16>, vector<128x128xbf16>, vector<8x128xf32> -> vector<8x128xf32>
    %c2_16 = arith.constant 2 : index
    %c0_17 = arith.constant 0 : index
    %27 = vector.load %arg3[%c2_16, %c0_17] : memref<7x128xf32, #tpu.memory_space<vmem>>, vector<1x128xf32>
    %28 = vector.shape_cast %27 : vector<1x128xf32> to vector<128xf32>
    %29 = vector.shape_cast %28 : vector<128xf32> to vector<1x128xf32>
    %30 = vector.broadcast %29 : vector<1x128xf32> to vector<8x128xf32>
    %31 = arith.addf %26, %30 : vector<8x128xf32>
    %cst_18 = arith.constant 0.000000e+00 : f32
    %32 = vector.broadcast %cst_18 : f32 to vector<8x128xf32>
    %33 = arith.maximumf %31, %32 : vector<8x128xf32>
    %34 = arith.truncf %33 : vector<8x128xf32> to vector<8x128xbf16>
    %c3 = arith.constant 3 : index
    %c0_19 = arith.constant 0 : index
    %c0_20 = arith.constant 0 : index
    %35 = vector.load %arg2[%c3, %c0_19, %c0_20] : memref<7x128x128xbf16, #tpu.memory_space<vmem>>, vector<1x128x128xbf16>
    %36 = vector.shape_cast %35 : vector<1x128x128xbf16> to vector<128x128xbf16>
    %cst_21 = arith.constant dense<0.000000e+00> : vector<8x128xf32>
    %37 = tpu.matmul %34, %36, %cst_21 {dimension_numbers = #tpu.dot_dimension_numbers<[1], [0], [0], [1], [0, 0, 1, 1], [], []>} : vector<8x128xbf16>, vector<128x128xbf16>, vector<8x128xf32> -> vector<8x128xf32>
    %c3_22 = arith.constant 3 : index
    %c0_23 = arith.constant 0 : index
    %38 = vector.load %arg3[%c3_22, %c0_23] : memref<7x128xf32, #tpu.memory_space<vmem>>, vector<1x128xf32>
    %39 = vector.shape_cast %38 : vector<1x128xf32> to vector<128xf32>
    %40 = vector.shape_cast %39 : vector<128xf32> to vector<1x128xf32>
    %41 = vector.broadcast %40 : vector<1x128xf32> to vector<8x128xf32>
    %42 = arith.addf %37, %41 : vector<8x128xf32>
    %cst_24 = arith.constant 0.000000e+00 : f32
    %43 = vector.broadcast %cst_24 : f32 to vector<8x128xf32>
    %44 = arith.maximumf %42, %43 : vector<8x128xf32>
    %45 = arith.truncf %44 : vector<8x128xf32> to vector<8x128xbf16>
    %c4 = arith.constant 4 : index
    %c0_25 = arith.constant 0 : index
    %c0_26 = arith.constant 0 : index
    %46 = vector.load %arg2[%c4, %c0_25, %c0_26] : memref<7x128x128xbf16, #tpu.memory_space<vmem>>, vector<1x128x128xbf16>
    %47 = vector.shape_cast %46 : vector<1x128x128xbf16> to vector<128x128xbf16>
    %cst_27 = arith.constant dense<0.000000e+00> : vector<8x128xf32>
    %48 = tpu.matmul %45, %47, %cst_27 {dimension_numbers = #tpu.dot_dimension_numbers<[1], [0], [0], [1], [0, 0, 1, 1], [], []>} : vector<8x128xbf16>, vector<128x128xbf16>, vector<8x128xf32> -> vector<8x128xf32>
    %c4_28 = arith.constant 4 : index
    %c0_29 = arith.constant 0 : index
    %49 = vector.load %arg3[%c4_28, %c0_29] : memref<7x128xf32, #tpu.memory_space<vmem>>, vector<1x128xf32>
    %50 = vector.shape_cast %49 : vector<1x128xf32> to vector<128xf32>
    %51 = vector.shape_cast %50 : vector<128xf32> to vector<1x128xf32>
    %52 = vector.broadcast %51 : vector<1x128xf32> to vector<8x128xf32>
    %53 = arith.addf %48, %52 : vector<8x128xf32>
    %cst_30 = arith.constant 0.000000e+00 : f32
    %54 = vector.broadcast %cst_30 : f32 to vector<8x128xf32>
    %55 = arith.maximumf %53, %54 : vector<8x128xf32>
    %56 = arith.truncf %55 : vector<8x128xf32> to vector<8x128xbf16>
    %c5 = arith.constant 5 : index
    %c0_31 = arith.constant 0 : index
    %c0_32 = arith.constant 0 : index
    %57 = vector.load %arg2[%c5, %c0_31, %c0_32] : memref<7x128x128xbf16, #tpu.memory_space<vmem>>, vector<1x128x128xbf16>
    %58 = vector.shape_cast %57 : vector<1x128x128xbf16> to vector<128x128xbf16>
    %cst_33 = arith.constant dense<0.000000e+00> : vector<8x128xf32>
    %59 = tpu.matmul %56, %58, %cst_33 {dimension_numbers = #tpu.dot_dimension_numbers<[1], [0], [0], [1], [0, 0, 1, 1], [], []>} : vector<8x128xbf16>, vector<128x128xbf16>, vector<8x128xf32> -> vector<8x128xf32>
    %c5_34 = arith.constant 5 : index
    %c0_35 = arith.constant 0 : index
    %60 = vector.load %arg3[%c5_34, %c0_35] : memref<7x128xf32, #tpu.memory_space<vmem>>, vector<1x128xf32>
    %61 = vector.shape_cast %60 : vector<1x128xf32> to vector<128xf32>
    %62 = vector.shape_cast %61 : vector<128xf32> to vector<1x128xf32>
    %63 = vector.broadcast %62 : vector<1x128xf32> to vector<8x128xf32>
    %64 = arith.addf %59, %63 : vector<8x128xf32>
    %cst_36 = arith.constant 0.000000e+00 : f32
    %65 = vector.broadcast %cst_36 : f32 to vector<8x128xf32>
    %66 = arith.maximumf %64, %65 : vector<8x128xf32>
    %67 = arith.truncf %66 : vector<8x128xf32> to vector<8x128xbf16>
    %c6 = arith.constant 6 : index
    %c0_37 = arith.constant 0 : index
    %c0_38 = arith.constant 0 : index
    %68 = vector.load %arg2[%c6, %c0_37, %c0_38] : memref<7x128x128xbf16, #tpu.memory_space<vmem>>, vector<1x128x128xbf16>
    %69 = vector.shape_cast %68 : vector<1x128x128xbf16> to vector<128x128xbf16>
    %cst_39 = arith.constant dense<0.000000e+00> : vector<8x128xf32>
    %70 = tpu.matmul %67, %69, %cst_39 {dimension_numbers = #tpu.dot_dimension_numbers<[1], [0], [0], [1], [0, 0, 1, 1], [], []>} : vector<8x128xbf16>, vector<128x128xbf16>, vector<8x128xf32> -> vector<8x128xf32>
    %c6_40 = arith.constant 6 : index
    %c0_41 = arith.constant 0 : index
    %71 = vector.load %arg3[%c6_40, %c0_41] : memref<7x128xf32, #tpu.memory_space<vmem>>, vector<1x128xf32>
    %72 = vector.shape_cast %71 : vector<1x128xf32> to vector<128xf32>
    %73 = vector.shape_cast %72 : vector<128xf32> to vector<1x128xf32>
    %74 = vector.broadcast %73 : vector<1x128xf32> to vector<8x128xf32>
    %75 = arith.addf %70, %74 : vector<8x128xf32>
    %c0_42 = arith.constant 0 : index
    %c0_43 = arith.constant 0 : index
    %76 = vector.load %arg4[%c0_42, %c0_43] : memref<8x128xf32, #tpu.memory_space<vmem>>, vector<8x128xf32>
    tpu.vector_store %arg4[%c0_42, %c0_43], %75 {strides = array<i32>} : memref<8x128xf32, #tpu.memory_space<vmem>>, vector<8x128xf32>,
    return
  }
  func.func @transform_0(%arg0: i32) -> (i32, i32) {
    %c0_i32 = arith.constant 0 : i32
    %c0_i32_0 = arith.constant 0 : i32
    return %arg0, %c0_i32 : i32, i32
  }
  func.func @transform_1(%arg0: i32) -> (i32, i32, i32) {
    %c0_i32 = arith.constant 0 : i32
    %c0_i32_0 = arith.constant 0 : i32
    %c0_i32_1 = arith.constant 0 : i32
    %c0_i32_2 = arith.constant 0 : i32
    return %c0_i32, %c0_i32_0, %c0_i32_1 : i32, i32, i32
  }
  func.func @transform_2(%arg0: i32) -> (i32, i32) {
    %c0_i32 = arith.constant 0 : i32
    %c0_i32_0 = arith.constant 0 : i32
    %c0_i32_1 = arith.constant 0 : i32
    return %c0_i32, %c0_i32_0 : i32, i32
  }
  func.func @transform_3(%arg0: i32) -> (i32, i32) {
    %c0_i32 = arith.constant 0 : i32
    %c0_i32_0 = arith.constant 0 : i32
    return %arg0, %c0_i32 : i32, i32
  }
}

</mosaic_0001>

<llo_original>
// kernel: perceptron_bwd_forward.1
$region0: #{perceptron_bwd_forward.1}
  #allocation0 [shape = 'u32[]', space=smem, size = 0x4, offset = 0x4, fixed_abs, tag = 'smem constant byte address 0x4 - core index']
  #allocation1 [shape = 'u32[72,128]{1,0:T(1,128)}', space=vmem, size = 0x9000, scoped, tag = 'internal scratch']
  %s0 = inlined_call_operand.vmem [shape: f32[8,32], index: 0, kind: input, shape index: {}]
  %s1 = inlined_call_operand.hbm [shape: bf16[7,128,128], index: 1, kind: input, shape index: {}]
  %s2 = inlined_call_operand.vmem [shape: f32[7,128], index: 2, kind: input, shape index: {}]
  %s3 = inlined_call_operand.vmem [shape: f32[8,128], index: 3, kind: output, shape index: {}]
  %s4 = sld [smem:[#allocation0]]
  $region26: #{perceptron_bwd_forward.1} parent=0
    _
  %s6 = ssub.s32 1, %s4
  %s7 = scalar_select 0, %s6, %s4
  $region1: #{perceptron_bwd_forward.1} parent=0
    #allocation2 [shape = 'u8[229376]{0}', space=vmem, size = 0x38000, scoped, tag = 'input window, operand 1, single buffered']
    #allocation3 [shape = 's32[1]{0}', space=sflag, size = 0x4, scoped, tag = 'scoped memory for perceptron_bwd_forward.1']
    %8 = vsyncpa [#allocation3], 0
    // Predicated region
    $region2: #{perceptron_bwd_forward.1} parent=1 // pred_check
      _
    $region3: #{perceptron_bwd_forward.1} parent=1 // pred_check_branch
      %10 = sbr.rel (0) target = $region5
    $region4: #{perceptron_bwd_forward.1} parent=1 // pred_region
      _
    $region5: #{perceptron_bwd_forward.1} parent=1 // pred_fallthru
      _
    // Predicated region
    $region6: #{perceptron_bwd_forward.1} parent=1 // pred_check
      _
    $region7: #{perceptron_bwd_forward.1} parent=1 // pred_check_branch
      %12 = sbr.rel (0) target = $region9
    $region8: #{perceptron_bwd_forward.1} parent=1 // pred_region
      %14 = vsyncadd [#allocation3], 0
      %s15 = sshll.u32 %s1, 4
      %s16 = int_to_ptr.hbm [resolvable:$true] %s15
      %s17 = sshll.u32 [#allocation2], 4
      %s18 = int_to_ptr.vmem [resolvable:$true] %s17
      %23 = dma.hbm_to_vmem [thread:$0]  %s16, 7168, %s18, [#allocation3], 64, 64, 4
    $region9: #{perceptron_bwd_forward.1} parent=1 // pred_fallthru
      _
    // Predicated region
    $region10: #{perceptron_bwd_forward.1} parent=1 // pred_check
      _
    $region11: #{perceptron_bwd_forward.1} parent=1 // pred_check_branch
      %25 = sbr.rel (0) target = $region13
    $region12: #{perceptron_bwd_forward.1} parent=1 // pred_region
      _
    $region13: #{perceptron_bwd_forward.1} parent=1 // pred_fallthru
      _
    // Predicated region
    $region14: #{perceptron_bwd_forward.1} parent=1 // pred_check
      _
    $region15: #{perceptron_bwd_forward.1} parent=1 // pred_check_branch
      %27 = sbr.rel (0) target = $region17
    $region16: #{perceptron_bwd_forward.1} parent=1 // pred_region
      %29 = dma.done [#allocation3], 7168
    $region17: #{perceptron_bwd_forward.1} parent=1 // pred_fallthru
      _
    %v31 = vld [vmem:[%s0] sm:$0xff]
    %v32 = vpack.c.bf16 %v31, %v31
    %v33 = vld [vmem:[#allocation2] sm:$0xf]
    %v34 = vld [vmem:[#allocation2 + $0x4] sm:$0xf]
    %v35 = vld [vmem:[#allocation2 + $0x8] sm:$0xf]
    %v36 = vld [vmem:[#allocation2 + $0xc] sm:$0xf]
    %v37 = vld [vmem:[%s2] sm:$0x1]
    %v38 = vperm.slane %v37, 0
    %v43 = vunpack.c.l.b16 %v33
    %v44 = vunpack.c.l.b16 %v34
    %v45 = vunpack.c.l.b16 %v35
    %v46 = vunpack.c.l.b16 %v36
    %v47 = vpack.c.b16 %v44, %v43
    %v48 = vpack.c.b16 %v46, %v45
    %vm51 = vcmask 261120
    %v53 = vsel %vm51, %v32, 0
    %55 = vmatpush.bf16.msra.mxu0 0
    %56 = vmatpush.bf16.msra.mxu0 0
    %57 = vmatpush.bf16.msra.mxu0 0
    %58 = vmatpush.bf16.msra.mxu0 0
    %59 = vmatpush.bf16.msra.mxu0 0
    %60 = vmatpush.bf16.msra.mxu0 0
    %61 = vmatpush.bf16.msra.mxu0 %v48
    %62 = vmatpush.bf16.msra.mxu0 %v47
    %63 = vmatmul.bf16.gmra.mxu0 %v53
    %v64 = vpop.f32.mrf.mxu0
    %v65 = vadd.f32 %v38, %v64
    %v66 = vpop.f32.mrf.mxu0
    %67 = vdwg.mxu0
    %v68 = vmax.f32 %v65, 0.0
    %v69 = vpack.c.bf16 %v68, %v68
    %s70 = scalar_lea.vmem [#allocation2], 64
    %v71 = vld [vmem:[%s70] sm:$0xf]
    %v72 = vld [vmem:[%s70 + $0x4] sm:$0xf]
    %v73 = vld [vmem:[%s70 + $0x8] sm:$0xf]
    %v74 = vld [vmem:[%s70 + $0xc] sm:$0xf]
    %v75 = vld [vmem:[%s70 + $0x10] sm:$0xf]
    %v76 = vld [vmem:[%s70 + $0x14] sm:$0xf]
    %v77 = vld [vmem:[%s70 + $0x18] sm:$0xf]
    %v78 = vld [vmem:[%s70 + $0x1c] sm:$0xf]
    %v79 = vld [vmem:[%s70 + $0x20] sm:$0xf]
    %v80 = vld [vmem:[%s70 + $0x24] sm:$0xf]
    %v81 = vld [vmem:[%s70 + $0x28] sm:$0xf]
    %v82 = vld [vmem:[%s70 + $0x2c] sm:$0xf]
    %v83 = vld [vmem:[%s70 + $0x30] sm:$0xf]
    %v84 = vld [vmem:[%s70 + $0x34] sm:$0xf]
    %v85 = vld [vmem:[%s70 + $0x38] sm:$0xf]
    %v86 = vld [vmem:[%s70 + $0x3c] sm:$0xf]
    %v87 = vld [vmem:[%s2 + $0x1] sm:$0x1]
    %v88 = vperm.slane %v87, 0
    %v105 = vunpack.c.l.b16 %v71
    %v106 = vunpack.c.l.b16 %v72
    %v107 = vunpack.c.l.b16 %v73
    %v108 = vunpack.c.l.b16 %v74
    %v109 = vunpack.c.l.b16 %v75
    %v110 = vunpack.c.l.b16 %v76
    %v111 = vunpack.c.l.b16 %v77
    %v112 = vunpack.c.l.b16 %v78
    %v113 = vunpack.c.l.b16 %v79
    %v114 = vunpack.c.l.b16 %v80
    %v115 = vunpack.c.l.b16 %v81
    %v116 = vunpack.c.l.b16 %v82
    %v117 = vunpack.c.l.b16 %v83
    %v118 = vunpack.c.l.b16 %v84
    %v119 = vunpack.c.l.b16 %v85
    %v120 = vunpack.c.l.b16 %v86
    %v121 = vpack.c.b16 %v106, %v105
    %v122 = vpack.c.b16 %v108, %v107
    %v123 = vpack.c.b16 %v110, %v109
    %v124 = vpack.c.b16 %v112, %v111
    %v125 = vpack.c.b16 %v114, %v113
    %v126 = vpack.c.b16 %v116, %v115
    %v127 = vpack.c.b16 %v118, %v117
    %v128 = vpack.c.b16 %v120, %v119
    %137 = vmatpush.bf16.msra.mxu0 %v128
    %138 = vmatpush.bf16.msra.mxu0 %v127
    %139 = vmatpush.bf16.msra.mxu0 %v126
    %140 = vmatpush.bf16.msra.mxu0 %v125
    %141 = vmatpush.bf16.msra.mxu0 %v124
    %142 = vmatpush.bf16.msra.mxu0 %v123
    %143 = vmatpush.bf16.msra.mxu0 %v122
    %144 = vmatpush.bf16.msra.mxu0 %v121
    %145 = vmatmul.bf16.gmra.mxu0 %v69
    %v146 = vpop.f32.mrf.mxu0
    %v147 = vadd.f32 %v88, %v146
    %v148 = vpop.f32.mrf.mxu0
    %149 = vdwg.mxu0
    %v150 = vmax.f32 %v147, 0.0
    %v151 = vpack.c.bf16 %v150, %v150
    %s152 = scalar_lea.vmem [#allocation2], 128
    %v153 = vld [vmem:[%s152] sm:$0xf]
    %v154 = vld [vmem:[%s152 + $0x4] sm:$0xf]
    %v155 = vld [vmem:[%s152 + $0x8] sm:$0xf]
    %v156 = vld [vmem:[%s152 + $0xc] sm:$0xf]
    %v157 = vld [vmem:[%s152 + $0x10] sm:$0xf]
    %v158 = vld [vmem:[%s152 + $0x14] sm:$0xf]
    %v159 = vld [vmem:[%s152 + $0x18] sm:$0xf]
    %v160 = vld [vmem:[%s152 + $0x1c] sm:$0xf]
    %v161 = vld [vmem:[%s152 + $0x20] sm:$0xf]
    %v162 = vld [vmem:[%s152 + $0x24] sm:$0xf]
    %v163 = vld [vmem:[%s152 + $0x28] sm:$0xf]
    %v164 = vld [vmem:[%s152 + $0x2c] sm:$0xf]
    %v165 = vld [vmem:[%s152 + $0x30] sm:$0xf]
    %v166 = vld [vmem:[%s152 + $0x34] sm:$0xf]
    %v167 = vld [vmem:[%s152 + $0x38] sm:$0xf]
    %v168 = vld [vmem:[%s152 + $0x3c] sm:$0xf]
    %v169 = vld [vmem:[%s2 + $0x2] sm:$0x1]
    %v170 = vperm.slane %v169, 0
    %v187 = vunpack.c.l.b16 %v153
    %v188 = vunpack.c.l.b16 %v154
    %v189 = vunpack.c.l.b16 %v155
    %v190 = vunpack.c.l.b16 %v156
    %v191 = vunpack.c.l.b16 %v157
    %v192 = vunpack.c.l.b16 %v158
    %v193 = vunpack.c.l.b16 %v159
    %v194 = vunpack.c.l.b16 %v160
    %v195 = vunpack.c.l.b16 %v161
    %v196 = vunpack.c.l.b16 %v162
    %v197 = vunpack.c.l.b16 %v163
    %v198 = vunpack.c.l.b16 %v164
    %v199 = vunpack.c.l.b16 %v165
    %v200 = vunpack.c.l.b16 %v166
    %v201 = vunpack.c.l.b16 %v167
    %v202 = vunpack.c.l.b16 %v168
    %v203 = vpack.c.b16 %v188, %v187
    %v204 = vpack.c.b16 %v190, %v189
    %v205 = vpack.c.b16 %v192, %v191
    %v206 = vpack.c.b16 %v194, %v193
    %v207 = vpack.c.b16 %v196, %v195
    %v208 = vpack.c.b16 %v198, %v197
    %v209 = vpack.c.b16 %v200, %v199
    %v210 = vpack.c.b16 %v202, %v201
    %219 = vmatpush.bf16.msra.mxu0 %v210
    %220 = vmatpush.bf16.msra.mxu0 %v209
    %221 = vmatpush.bf16.msra.mxu0 %v208
    %222 = vmatpush.bf16.msra.mxu0 %v207
    %223 = vmatpush.bf16.msra.mxu0 %v206
    %224 = vmatpush.bf16.msra.mxu0 %v205
    %225 = vmatpush.bf16.msra.mxu0 %v204
    %226 = vmatpush.bf16.msra.mxu0 %v203
    %227 = vmatmul.bf16.gmra.mxu0 %v151
    %v228 = vpop.f32.mrf.mxu0
    %v229 = vadd.f32 %v170, %v228
    %v230 = vpop.f32.mrf.mxu0
    %231 = vdwg.mxu0
    %v232 = vmax.f32 %v229, 0.0
    %v233 = vpack.c.bf16 %v232, %v232
    %s234 = scalar_lea.vmem [#allocation2], 192
    %v235 = vld [vmem:[%s234] sm:$0xf]
    %v236 = vld [vmem:[%s234 + $0x4] sm:$0xf]
    %v237 = vld [vmem:[%s234 + $0x8] sm:$0xf]
    %v238 = vld [vmem:[%s234 + $0xc] sm:$0xf]
    %v239 = vld [vmem:[%s234 + $0x10] sm:$0xf]
    %v240 = vld [vmem:[%s234 + $0x14] sm:$0xf]
    %v241 = vld [vmem:[%s234 + $0x18] sm:$0xf]
    %v242 = vld [vmem:[%s234 + $0x1c] sm:$0xf]
    %v243 = vld [vmem:[%s234 + $0x20] sm:$0xf]
    %v244 = vld [vmem:[%s234 + $0x24] sm:$0xf]
    %v245 = vld [vmem:[%s234 + $0x28] sm:$0xf]
    %v246 = vld [vmem:[%s234 + $0x2c] sm:$0xf]
    %v247 = vld [vmem:[%s234 + $0x30] sm:$0xf]
    %v248 = vld [vmem:[%s234 + $0x34] sm:$0xf]
    %v249 = vld [vmem:[%s234 + $0x38] sm:$0xf]
    %v250 = vld [vmem:[%s234 + $0x3c] sm:$0xf]
    %v251 = vld [vmem:[%s2 + $0x3] sm:$0x1]
    %v252 = vperm.slane %v251, 0
    %v269 = vunpack.c.l.b16 %v235
    %v270 = vunpack.c.l.b16 %v236
    %v271 = vunpack.c.l.b16 %v237
    %v272 = vunpack.c.l.b16 %v238
    %v273 = vunpack.c.l.b16 %v239
    %v274 = vunpack.c.l.b16 %v240
    %v275 = vunpack.c.l.b16 %v241
    %v276 = vunpack.c.l.b16 %v242
    %v277 = vunpack.c.l.b16 %v243
    %v278 = vunpack.c.l.b16 %v244
    %v279 = vunpack.c.l.b16 %v245
    %v280 = vunpack.c.l.b16 %v246
    %v281 = vunpack.c.l.b16 %v247
    %v282 = vunpack.c.l.b16 %v248
    %v283 = vunpack.c.l.b16 %v249
    %v284 = vunpack.c.l.b16 %v250
    %v285 = vpack.c.b16 %v270, %v269
    %v286 = vpack.c.b16 %v272, %v271
    %v287 = vpack.c.b16 %v274, %v273
    %v288 = vpack.c.b16 %v276, %v275
    %v289 = vpack.c.b16 %v278, %v277
    %v290 = vpack.c.b16 %v280, %v279
    %v291 = vpack.c.b16 %v282, %v281
    %v292 = vpack.c.b16 %v284, %v283
    %301 = vmatpush.bf16.msra.mxu0 %v292
    %302 = vmatpush.bf16.msra.mxu0 %v291
    %303 = vmatpush.bf16.msra.mxu0 %v290
    %304 = vmatpush.bf16.msra.mxu0 %v289
    %305 = vmatpush.bf16.msra.mxu0 %v288
    %306 = vmatpush.bf16.msra.mxu0 %v287
    %307 = vmatpush.bf16.msra.mxu0 %v286
    %308 = vmatpush.bf16.msra.mxu0 %v285
    %309 = vmatmul.bf16.gmra.mxu0 %v233
    %v310 = vpop.f32.mrf.mxu0
    %v311 = vadd.f32 %v252, %v310
    %v312 = vpop.f32.mrf.mxu0
    %313 = vdwg.mxu0
    %v314 = vmax.f32 %v311, 0.0
    %v315 = vpack.c.bf16 %v314, %v314
    %s316 = scalar_lea.vmem [#allocation2], 256
    %v317 = vld [vmem:[%s316] sm:$0xf]
    %v318 = vld [vmem:[%s316 + $0x4] sm:$0xf]
    %v319 = vld [vmem:[%s316 + $0x8] sm:$0xf]
    %v320 = vld [vmem:[%s316 + $0xc] sm:$0xf]
    %v321 = vld [vmem:[%s316 + $0x10] sm:$0xf]
    %v322 = vld [vmem:[%s316 + $0x14] sm:$0xf]
    %v323 = vld [vmem:[%s316 + $0x18] sm:$0xf]
    %v324 = vld [vmem:[%s316 + $0x1c] sm:$0xf]
    %v325 = vld [vmem:[%s316 + $0x20] sm:$0xf]
    %v326 = vld [vmem:[%s316 + $0x24] sm:$0xf]
    %v327 = vld [vmem:[%s316 + $0x28] sm:$0xf]
    %v328 = vld [vmem:[%s316 + $0x2c] sm:$0xf]
    %v329 = vld [vmem:[%s316 + $0x30] sm:$0xf]
    %v330 = vld [vmem:[%s316 + $0x34] sm:$0xf]
    %v331 = vld [vmem:[%s316 + $0x38] sm:$0xf]
    %v332 = vld [vmem:[%s316 + $0x3c] sm:$0xf]
    %v333 = vld [vmem:[%s2 + $0x4] sm:$0x1]
    %v334 = vperm.slane %v333, 0
    %v351 = vunpack.c.l.b16 %v317
    %v352 = vunpack.c.l.b16 %v318
    %v353 = vunpack.c.l.b16 %v319
    %v354 = vunpack.c.l.b16 %v320
    %v355 = vunpack.c.l.b16 %v321
    %v356 = vunpack.c.l.b16 %v322
    %v357 = vunpack.c.l.b16 %v323
    %v358 = vunpack.c.l.b16 %v324
    %v359 = vunpack.c.l.b16 %v325
    %v360 = vunpack.c.l.b16 %v326
    %v361 = vunpack.c.l.b16 %v327
    %v362 = vunpack.c.l.b16 %v328
    %v363 = vunpack.c.l.b16 %v329
    %v364 = vunpack.c.l.b16 %v330
    %v365 = vunpack.c.l.b16 %v331
    %v366 = vunpack.c.l.b16 %v332
    %v367 = vpack.c.b16 %v352, %v351
    %v368 = vpack.c.b16 %v354, %v353
    %v369 = vpack.c.b16 %v356, %v355
    %v370 = vpack.c.b16 %v358, %v357
    %v371 = vpack.c.b16 %v360, %v359
    %v372 = vpack.c.b16 %v362, %v361
    %v373 = vpack.c.b16 %v364, %v363
    %v374 = vpack.c.b16 %v366, %v365
    %383 = vmatpush.bf16.msra.mxu0 %v374
    %384 = vmatpush.bf16.msra.mxu0 %v373
    %385 = vmatpush.bf16.msra.mxu0 %v372
    %386 = vmatpush.bf16.msra.mxu0 %v371
    %387 = vmatpush.bf16.msra.mxu0 %v370
    %388 = vmatpush.bf16.msra.mxu0 %v369
    %389 = vmatpush.bf16.msra.mxu0 %v368
    %390 = vmatpush.bf16.msra.mxu0 %v367
    %391 = vmatmul.bf16.gmra.mxu0 %v315
    %v392 = vpop.f32.mrf.mxu0
    %v393 = vadd.f32 %v334, %v392
    %v394 = vpop.f32.mrf.mxu0
    %395 = vdwg.mxu0
    %v396 = vmax.f32 %v393, 0.0
    %v397 = vpack.c.bf16 %v396, %v396
    %s398 = scalar_lea.vmem [#allocation2], 320
    %v399 = vld [vmem:[%s398] sm:$0xf]
    %v400 = vld [vmem:[%s398 + $0x4] sm:$0xf]
    %v401 = vld [vmem:[%s398 + $0x8] sm:$0xf]
    %v402 = vld [vmem:[%s398 + $0xc] sm:$0xf]
    %v403 = vld [vmem:[%s398 + $0x10] sm:$0xf]
    %v404 = vld [vmem:[%s398 + $0x14] sm:$0xf]
    %v405 = vld [vmem:[%s398 + $0x18] sm:$0xf]
    %v406 = vld [vmem:[%s398 + $0x1c] sm:$0xf]
    %v407 = vld [vmem:[%s398 + $0x20] sm:$0xf]
    %v408 = vld [vmem:[%s398 + $0x24] sm:$0xf]
    %v409 = vld [vmem:[%s398 + $0x28] sm:$0xf]
    %v410 = vld [vmem:[%s398 + $0x2c] sm:$0xf]
    %v411 = vld [vmem:[%s398 + $0x30] sm:$0xf]
    %v412 = vld [vmem:[%s398 + $0x34] sm:$0xf]
    %v413 = vld [vmem:[%s398 + $0x38] sm:$0xf]
    %v414 = vld [vmem:[%s398 + $0x3c] sm:$0xf]
    %v415 = vld [vmem:[%s2 + $0x5] sm:$0x1]
    %v416 = vperm.slane %v415, 0
    %v433 = vunpack.c.l.b16 %v399
    %v434 = vunpack.c.l.b16 %v400
    %v435 = vunpack.c.l.b16 %v401
    %v436 = vunpack.c.l.b16 %v402
    %v437 = vunpack.c.l.b16 %v403
    %v438 = vunpack.c.l.b16 %v404
    %v439 = vunpack.c.l.b16 %v405
    %v440 = vunpack.c.l.b16 %v406
    %v441 = vunpack.c.l.b16 %v407
    %v442 = vunpack.c.l.b16 %v408
    %v443 = vunpack.c.l.b16 %v409
    %v444 = vunpack.c.l.b16 %v410
    %v445 = vunpack.c.l.b16 %v411
    %v446 = vunpack.c.l.b16 %v412
    %v447 = vunpack.c.l.b16 %v413
    %v448 = vunpack.c.l.b16 %v414
    %v449 = vpack.c.b16 %v434, %v433
    %v450 = vpack.c.b16 %v436, %v435
    %v451 = vpack.c.b16 %v438, %v437
    %v452 = vpack.c.b16 %v440, %v439
    %v453 = vpack.c.b16 %v442, %v441
    %v454 = vpack.c.b16 %v444, %v443
    %v455 = vpack.c.b16 %v446, %v445
    %v456 = vpack.c.b16 %v448, %v447
    %465 = vmatpush.bf16.msra.mxu0 %v456
    %466 = vmatpush.bf16.msra.mxu0 %v455
    %467 = vmatpush.bf16.msra.mxu0 %v454
    %468 = vmatpush.bf16.msra.mxu0 %v453
    %469 = vmatpush.bf16.msra.mxu0 %v452
    %470 = vmatpush.bf16.msra.mxu0 %v451
    %471 = vmatpush.bf16.msra.mxu0 %v450
    %472 = vmatpush.bf16.msra.mxu0 %v449
    %473 = vmatmul.bf16.gmra.mxu0 %v397
    %v474 = vpop.f32.mrf.mxu0
    %v475 = vadd.f32 %v416, %v474
    %v476 = vpop.f32.mrf.mxu0
    %477 = vdwg.mxu0
    %v478 = vmax.f32 %v475, 0.0
    %v479 = vpack.c.bf16 %v478, %v478
    %s480 = scalar_lea.vmem [#allocation2], 384
    %v481 = vld [vmem:[%s480] sm:$0xf]
    %v482 = vld [vmem:[%s480 + $0x4] sm:$0xf]
    %v483 = vld [vmem:[%s480 + $0x8] sm:$0xf]
    %v484 = vld [vmem:[%s480 + $0xc] sm:$0xf]
    %v485 = vld [vmem:[%s480 + $0x10] sm:$0xf]
    %v486 = vld [vmem:[%s480 + $0x14] sm:$0xf]
    %v487 = vld [vmem:[%s480 + $0x18] sm:$0xf]
    %v488 = vld [vmem:[%s480 + $0x1c] sm:$0xf]
    %v489 = vld [vmem:[%s480 + $0x20] sm:$0xf]
    %v490 = vld [vmem:[%s480 + $0x24] sm:$0xf]
    %v491 = vld [vmem:[%s480 + $0x28] sm:$0xf]
    %v492 = vld [vmem:[%s480 + $0x2c] sm:$0xf]
    %v493 = vld [vmem:[%s480 + $0x30] sm:$0xf]
    %v494 = vld [vmem:[%s480 + $0x34] sm:$0xf]
    %v495 = vld [vmem:[%s480 + $0x38] sm:$0xf]
    %v496 = vld [vmem:[%s480 + $0x3c] sm:$0xf]
    %v497 = vld [vmem:[%s2 + $0x6] sm:$0x1]
    %v498 = vperm.slane %v497, 0
    %v515 = vunpack.c.l.b16 %v481
    %v516 = vunpack.c.l.b16 %v482
    %v517 = vunpack.c.l.b16 %v483
    %v518 = vunpack.c.l.b16 %v484
    %v519 = vunpack.c.l.b16 %v485
    %v520 = vunpack.c.l.b16 %v486
    %v521 = vunpack.c.l.b16 %v487
    %v522 = vunpack.c.l.b16 %v488
    %v523 = vunpack.c.l.b16 %v489
    %v524 = vunpack.c.l.b16 %v490
    %v525 = vunpack.c.l.b16 %v491
    %v526 = vunpack.c.l.b16 %v492
    %v527 = vunpack.c.l.b16 %v493
    %v528 = vunpack.c.l.b16 %v494
    %v529 = vunpack.c.l.b16 %v495
    %v530 = vunpack.c.l.b16 %v496
    %v531 = vpack.c.b16 %v516, %v515
    %v532 = vpack.c.b16 %v518, %v517
    %v533 = vpack.c.b16 %v520, %v519
    %v534 = vpack.c.b16 %v522, %v521
    %v535 = vpack.c.b16 %v524, %v523
    %v536 = vpack.c.b16 %v526, %v525
    %v537 = vpack.c.b16 %v528, %v527
    %v538 = vpack.c.b16 %v530, %v529
    %547 = vmatpush.bf16.msra.mxu0 %v538
    %548 = vmatpush.bf16.msra.mxu0 %v537
    %549 = vmatpush.bf16.msra.mxu0 %v536
    %550 = vmatpush.bf16.msra.mxu0 %v535
    %551 = vmatpush.bf16.msra.mxu0 %v534
    %552 = vmatpush.bf16.msra.mxu0 %v533
    %553 = vmatpush.bf16.msra.mxu0 %v532
    %554 = vmatpush.bf16.msra.mxu0 %v531
    %555 = vmatmul.bf16.gmra.mxu0 %v479
    %v556 = vpop.f32.mrf.mxu0
    %v557 = vadd.f32 %v498, %v556
    %v558 = vpop.f32.mrf.mxu0
    %559 = vdwg.mxu0
    %560 = vst [vmem:[%s3] sm:$0xff] %v557
    // Predicated region
    $region18: #{perceptron_bwd_forward.1} parent=1 // pred_check
      _
    $region19: #{perceptron_bwd_forward.1} parent=1 // pred_check_branch
      %562 = sbr.rel (0) target = $region21
    $region20: #{perceptron_bwd_forward.1} parent=1 // pred_region
      _
    $region21: #{perceptron_bwd_forward.1} parent=1 // pred_fallthru
      _
    // Predicated region
    $region22: #{perceptron_bwd_forward.1} parent=1 // pred_check
      _
    $region23: #{perceptron_bwd_forward.1} parent=1 // pred_check_branch
      %564 = sbr.rel (0) target = $region25
    $region24: #{perceptron_bwd_forward.1} parent=1 // pred_region
      _
    $region25: #{perceptron_bwd_forward.1} parent=1 // pred_fallthru
      _
    %565 = vsyncpa [#allocation3], 1

</llo_original>
